<compile_context>
chip_gen: v7x
topology: tpu7x:2x2x1
jax: 0.10.0
libtpu: 0.0.40
codegen_flags: <defaults>
</compile_context>

<pallas_src>
import jax
import jax.numpy as jnp
from jax.experimental import pallas as pl
from jax.experimental.pallas import tpu as pltpu


def _identity_kernel(x_ref, o_ref):
    # DummyLayerNorm.forward(x) == x : copy the lane-dense 2D tile unchanged.
    o_ref[...] = x_ref[...]


def _pick_lane(n):
    """Widest lane-dense width (multiple of 128) that divides the element count."""
    for cand in (1024, 512, 256, 128):
        if n % cand == 0:
            return cand
    return None


def _pick_row_tile(rows, lane, itemsize, max_tile_bytes=2 << 20):
    """Largest row tile (multiple of 8) whose bytes stay <= max_tile_bytes.

    Keeps input + output double-buffered VMEM usage <= 4 * max_tile_bytes,
    within scoped-VMEM defaults on every TPU generation (v5e/v6e/v7x).
    """
    if rows % 8 != 0:
        return rows  # tiny/odd shapes: single full-extent block (equals array dim)
    for cand in (1024, 512, 256, 128, 64, 32, 16, 8):
        if rows % cand == 0 and cand * lane * itemsize <= max_tile_bytes:
            return cand
    return 8


def dummy_layer_norm(x, normalized_shape=None, eps=1e-5):
    """Pallas implementation of DummyLayerNorm.forward: returns x unchanged.

    normalized_shape / eps are accepted for API parity but unused (the module
    defines no parameters and applies no normalization).
    """
    del normalized_shape, eps  # module __init__ ignores them

    orig_shape = x.shape
    n = x.size
    if n == 0:
        return x
    itemsize = jnp.dtype(x.dtype).itemsize

    lane = _pick_lane(n)
    if lane is None:
        rows, lane = 1, n  # lane-sparse fallback for odd element counts
    else:
        rows = n // lane
    x2d = x.reshape(rows, lane)

    tr = _pick_row_tile(rows, lane, itemsize)
    grid = (rows // tr,)

    y2d = pl.pallas_call(
        _identity_kernel,
        out_shape=jax.ShapeDtypeStruct((rows, lane), x.dtype),
        grid=grid,
        in_specs=[pl.BlockSpec((tr, lane), lambda r: (r, 0))],
        out_specs=pl.BlockSpec((tr, lane), lambda r: (r, 0)),
        # Output aliases the input slab: no extra HBM allocation for the result.
        input_output_aliases={0: 0},
        compiler_params=pltpu.CompilerParams(
            # Row-tiled axis is independent work: shard across v7x's 2 TCs;
            # no-op on single-TC v5e/v6e.
            dimension_semantics=("parallel",),
        ),
    )(x2d)
    return y2d.reshape(orig_shape)


if __name__ == "__main__":
    key = jax.random.PRNGKey(0)
    # batch=2, seq=8, hidden=32 -> normalized_shape would be 32 (unused by the module).
    x = jax.random.normal(key, (2, 8, 32), dtype=jnp.float32)

    y = dummy_layer_norm(x, normalized_shape=32, eps=1e-5)
    y = jax.block_until_ready(y)

    assert y.shape == x.shape and y.dtype == x.dtype
    assert bool(jnp.all(y == x)), "identity kernel mismatch"
    print("KERNEL_OK")
</pallas_src>

<mosaic_0001>
module attributes {stable_mosaic.version = 11 : i64} {
  func.func @_identity_kernel(%arg0: i32, %arg1: memref<1x512xf32, #tpu.memory_space<vmem>>, %arg2: memref<1x512xf32, #tpu.memory_space<vmem>>) attributes {dimension_semantics = [#tpu.dimension_semantics<parallel>], iteration_bounds = array<i64: 1>, scalar_prefetch = 0 : i64, scratch_operands = 0 : i64, tpu.core_type = #tpu.core_type<tc>, window_params = [{transform_indices = @transform_0, window_bounds = array<i64: 1, 512>}, {transform_indices = @transform_1, window_bounds = array<i64: 1, 512>}]} {
    %c0 = arith.constant 0 : index
    %c0_0 = arith.constant 0 : index
    %0 = vector.load %arg1[%c0, %c0_0] : memref<1x512xf32, #tpu.memory_space<vmem>>, vector<1x512xf32>
    %c0_1 = arith.constant 0 : index
    %c0_2 = arith.constant 0 : index
    %1 = vector.load %arg2[%c0_1, %c0_2] : memref<1x512xf32, #tpu.memory_space<vmem>>, vector<1x512xf32>
    tpu.vector_store %arg2[%c0_1, %c0_2], %0 {strides = array<i32>} : memref<1x512xf32, #tpu.memory_space<vmem>>, vector<1x512xf32>,
    return
  }
  func.func @transform_0(%arg0: i32) -> (i32, i32) {
    %c0_i32 = arith.constant 0 : i32
    %c0_i32_0 = arith.constant 0 : i32
    return %arg0, %c0_i32 : i32, i32
  }
  func.func @transform_1(%arg0: i32) -> (i32, i32) {
    %c0_i32 = arith.constant 0 : i32
    %c0_i32_0 = arith.constant 0 : i32
    return %arg0, %c0_i32 : i32, i32
  }
}

</mosaic_0001>

<llo_original>
// kernel: tpu_custom_call.1
$region0: #{tpu_custom_call.1}
  #allocation0 [shape = 'u32[]', space=smem, size = 0x4, offset = 0x4, fixed_abs, tag = 'smem constant byte address 0x4 - core index']
  #allocation1 [shape = 'u32[144,128]{1,0:T(1,128)}', space=vmem, size = 0x12000, scoped, tag = 'internal scratch']
  %s0 = inlined_call_operand.hbm [shape: f32[1,512], index: 0, kind: input, shape index: {}, may-alias: {0,1}]
  %s1 = inlined_call_operand.hbm [shape: f32[1,512], index: 1, kind: output, shape index: {}, may-alias: {0,1}]
  %s2 = sld [smem:[#allocation0]]
  $region18: #{tpu_custom_call.1} parent=0
    _
  %s4 = ssub.s32 1, %s2
  %s5 = scalar_select 0, %s4, %s2
  $region1: #{tpu_custom_call.1} parent=0
    #allocation2 [shape = 'u8[2048]{0}', space=vmem, size = 0x800, scoped, tag = 'input window, operand 0, single buffered']
    #allocation3 [shape = 's32[1]{0}', space=sflag, size = 0x4, scoped, tag = 'scoped memory for tpu_custom_call.1']
    #allocation4 [shape = 's32[1]{0}', space=sflag, size = 0x4, scoped, tag = 'scoped memory for tpu_custom_call.1']
    #allocation5 [shape = 'u8[2048]{0}', space=vmem, size = 0x800, scoped, tag = 'output window, operand 0, single buffered']
    %6 = vsyncpa [#allocation3], 0
    %7 = vsyncpa [#allocation4], 0
    // Predicated region
    $region2: #{tpu_custom_call.1} parent=1 // pred_check
      _
    $region3: #{tpu_custom_call.1} parent=1 // pred_check_branch
      %9 = sbr.rel (0) target = $region5
    $region4: #{tpu_custom_call.1} parent=1 // pred_region
      %s11 = ssub.s32 64, 64
      %12 = vsyncadd [#allocation3], %s11
      %s14 = sshll.u32 [#allocation2], 4
      %s15 = int_to_ptr.vmem [resolvable:$true] %s14
      %17 = dma.hbm_to_vmem [thread:$0]  %s0, 64, %s15, [#allocation3]
    $region5: #{tpu_custom_call.1} parent=1 // pred_fallthru
      _
    // Predicated region
    $region6: #{tpu_custom_call.1} parent=1 // pred_check
      _
    $region7: #{tpu_custom_call.1} parent=1 // pred_check_branch
      %19 = sbr.rel (0) target = $region9
    $region8: #{tpu_custom_call.1} parent=1 // pred_region
      %20 = dma.done [#allocation3], 64
    $region9: #{tpu_custom_call.1} parent=1 // pred_fallthru
      _
    %v21 = vld [vmem:[#allocation2] sm:$0xf]
    %v22 = vlaneseq
    %vm23 = vcmp.ge.s32.totalorder %v22, 0
    %vm24 = vcmp.lt.s32.totalorder %v22, 512
    %vm25 = vmand %vm23, %vm24
    %26 = vst.msk [vmem:[#allocation5] sm:$0xf] %vm25, %v21
    // Predicated region
    $region10: #{tpu_custom_call.1} parent=1 // pred_check
      _
    $region11: #{tpu_custom_call.1} parent=1 // pred_check_branch
      %28 = sbr.rel (0) target = $region13
    $region12: #{tpu_custom_call.1} parent=1 // pred_region
      %s30 = ssub.s32 64, 64
      %31 = vsyncadd [#allocation4], %s30
      %s33 = sshll.u32 [#allocation5], 4
      %s34 = int_to_ptr.vmem [resolvable:$true] %s33
      %36 = dma.vmem_to_hbm [thread:$0]  %s34, 64, %s1, [#allocation4]
    $region13: #{tpu_custom_call.1} parent=1 // pred_fallthru
      _
    // Predicated region
    $region14: #{tpu_custom_call.1} parent=1 // pred_check
      _
    $region15: #{tpu_custom_call.1} parent=1 // pred_check_branch
      %38 = sbr.rel (0) target = $region17
    $region16: #{tpu_custom_call.1} parent=1 // pred_region
      %39 = dma.done [#allocation4], 64
    $region17: #{tpu_custom_call.1} parent=1 // pred_fallthru
      _
    %40 = vsyncpa [#allocation3], 1
    %41 = vsyncpa [#allocation4], 1

</llo_original>
